<compile_context>
chip_gen: v6e
topology: v6e:2x2x1
jax: 0.10.0
libtpu: 0.0.40
codegen_flags: <defaults>
</compile_context>

<pallas_src>
import functools

import jax
import jax.numpy as jnp
from jax import lax
from jax.experimental import pallas as pl
from jax.experimental.pallas import tpu as pltpu

_LANE = 128
_H_OFF = 8  # sublane-aligned row offset of h inside the zero-haloed scratch


def _round_up(n, m):
    return ((n + m - 1) // m) * m


def _ffn_kernel(x_ref, w1_ref, b1_ref, w2_ref, b2_ref, o_ref, hpad_ref, *acc_refs,
                T, T_out, stride, n_ff, h_off):
    # x_ref:    (Bb, T, d_model_p)        compute dtype
    # w1_ref:   (d_model_p, t_ff)         compute dtype
    # b1_ref:   (1, t_ff)                 f32
    # w2_ref:   (3, t_ff, d_model_p)      compute dtype (tap index leading)
    # b2_ref:   (1, d_model_p)            f32
    # o_ref:    (Bb, T_out, d_model_p)
    # hpad_ref: (Bb, T_halo, t_ff)        compute-dtype scratch, zero halo rows
    # acc_refs: () if n_ff == 1 else ((Bb*T_out, d_model_p) f32 accumulator,)
    kf = pl.program_id(1)
    Bb, _, d_model_p = o_ref.shape
    T_halo, t_ff = hpad_ref.shape[1], hpad_ref.shape[2]
    cdt = hpad_ref.dtype

    # Zero the halo rows once per batch block; the h store below never touches
    # them, so they stay zero across the whole d_ff-slab (kf) loop.
    @pl.when(kf == 0)
    def _():
        hpad_ref[:, pl.ds(0, h_off), :] = jnp.zeros((Bb, h_off, t_ff), cdt)
        tail = T_halo - (h_off + T)
        hpad_ref[:, pl.ds(h_off + T, tail), :] = jnp.zeros((Bb, tail, t_ff), cdt)

    # --- w_1 (pointwise conv) + bias + ReLU on a (Bb*T, d_model_p) LHS for a
    # bigger MXU M-dim; result lands at sublane-aligned offset h_off (unmasked vst).
    x2 = x_ref[...].reshape(Bb * T, d_model_p)
    h = jnp.dot(x2, w1_ref[...], preferred_element_type=jnp.float32)
    h = jnp.maximum(h + b1_ref[...], 0.0)
    hpad_ref[:, pl.ds(h_off, T), :] = h.reshape(Bb, T, t_ff).astype(cdt)
    # Dropout is identity at inference.  # TODO(synk): training-mode dropout not implemented.

    # --- w_2: kernel-3, stride-s conv evaluated only at the strided output rows:
    #   out[b, r] = sum_k hpad[b, (h_off - 1) + r*stride + k] @ W2[k]   (+ b2)
    # TODO(synk): if a bundle dump shows the strided sublane reads materializing
    # relayout copies, switch hpad to a phase-split (stride-major) layout.
    def window(k):
        start = h_off - 1 + k
        if stride == 1:
            w = hpad_ref[:, pl.ds(start, T_out), :]
        else:
            w = hpad_ref[:, pl.ds(start, T_out, stride=stride), :]
        return w.reshape(Bb * T_out, t_ff)

    contrib = jnp.dot(window(0), w2_ref[0], preferred_element_type=jnp.float32)
    contrib = contrib + jnp.dot(window(1), w2_ref[1],
                                preferred_element_type=jnp.float32)
    contrib = contrib + jnp.dot(window(2), w2_ref[2],
                                preferred_element_type=jnp.float32)

    if n_ff == 1:
        # Single d_ff slab (common case): no accumulator pass, write output directly.
        o_ref[...] = (contrib + b2_ref[...]).reshape(
            Bb, T_out, d_model_p).astype(o_ref.dtype)
    else:
        acc_ref = acc_refs[0]

        @pl.when(kf == 0)
        def _():
            acc_ref[...] = contrib + b2_ref[...]

        @pl.when(kf != 0)
        def _():
            acc_ref[...] += contrib

        @pl.when(kf == pl.num_programs(1) - 1)
        def _():
            o_ref[...] = acc_ref[...].reshape(
                Bb, T_out, d_model_p).astype(o_ref.dtype)


def positionwise_feed_forward(x, w1_weight, w1_bias, w2_weight, w2_bias, *,
                              stride, compute_dtype=jnp.float32, t_ff_max=1024):
    """x: (B, T, d_model).  Weights in PyTorch Conv1d layout:
         w1_weight (d_ff, d_model, 1), w1_bias (d_ff,),
         w2_weight (d_model, d_ff, 3), w2_bias (d_model,).
       compute_dtype: dtype fed to the MXU (jnp.bfloat16 recommended on
       v5e/v6e/v7x); bias / ReLU / accumulation stay in f32."""
    B, T, d_model = x.shape
    d_ff = w1_weight.shape[0]
    T_out = (T + 2 * 1 - 3) // stride + 1
    out_dtype = x.dtype
    cdt = jnp.dtype(compute_dtype)
    isz = cdt.itemsize
    osz = jnp.dtype(out_dtype).itemsize

    d_model_p = _round_up(d_model, _LANE)
    T_halo = _round_up(_H_OFF + T + 1, 8)

    # Physical VMEM (v5e/v6e ~128 MiB, v7x 64 MiB); keep ~20% compiler headroom.
    try:
        phys_vmem = int(pltpu.get_tpu_info().vmem_capacity_bytes)
    except Exception:  # API unavailable -> conservative default
        phys_vmem = 64 << 20
    vmem_cap = int(phys_vmem * 0.8)

    def _sizes(t_ff):
        d_ff_p = _round_up(d_ff, t_ff)
        n_ff = d_ff_p // t_ff
        # Weights are double-buffered by the pipeline.
        wbytes = (2 * (d_model_p * t_ff + 3 * t_ff * d_model_p) * isz
                  + 2 * (8 * t_ff + 8 * d_model_p) * 4)

        def per_block(bb):
            return (2 * bb * T * d_model_p * isz            # x tile (double-buffered)
                    + 2 * bb * T_out * d_model_p * osz      # out tile (double-buffered)
                    + bb * T_halo * t_ff * isz               # hpad scratch
                    + (bb * T_out * d_model_p * 4 if n_ff > 1 else 0)  # f32 acc
                    + bb * T * t_ff * 4                      # h temporary (f32)
                    + bb * T_out * d_model_p * 4             # contrib temporary (f32)
                    + 3 * bb * T_out * t_ff * isz)           # strided tap windows
        return d_ff_p, n_ff, wbytes, per_block

    t_ff = min(_round_up(d_ff, _LANE), _round_up(t_ff_max, _LANE))
    d_ff_p, n_ff, weight_bytes, per_block = _sizes(t_ff)
    while t_ff > _LANE and weight_bytes + per_block(1) + (2 << 20) > vmem_cap:
        t_ff = max(_LANE, _round_up(t_ff // 2, _LANE))
        d_ff_p, n_ff, weight_bytes, per_block = _sizes(t_ff)

    # Batch tile: amortize per-step overhead / weight re-streaming, but keep
    # >= 2 parallel batch steps so both v7x TensorCores stay busy.
    budget = vmem_cap - weight_bytes - (2 << 20)
    Bb = 1
    for cand in (8, 4, 2):
        if B % cand == 0 and B // cand >= 2 and per_block(cand) <= budget:
            Bb = cand
            break

    vmem_limit = int(min(max(weight_bytes + per_block(Bb) + (2 << 20), 16 << 20),
                         vmem_cap))

    # ---- Host-side layout prep (skipped when channels are already lane-aligned).
    w1m = jnp.transpose(w1_weight[:, :, 0], (1, 0)).astype(cdt)   # (d_model, d_ff)
    w2m = jnp.transpose(w2_weight, (2, 1, 0)).astype(cdt)         # (3, d_ff, d_model)
    if (d_model_p, d_ff_p) == (d_model, d_ff):
        W1, W2 = w1m, w2m
    else:
        W1 = jnp.zeros((d_model_p, d_ff_p), cdt).at[:d_model, :d_ff].set(w1m)
        W2 = jnp.zeros((3, d_ff_p, d_model_p), cdt).at[:, :d_ff, :d_model].set(w2m)
    b1 = jnp.zeros((1, d_ff_p), jnp.float32).at[:, :d_ff].set(
        w1_bias.astype(jnp.float32))
    b2 = jnp.zeros((1, d_model_p), jnp.float32).at[:, :d_model].set(
        w2_bias.astype(jnp.float32))
    if d_model_p == d_model:
        xp = x if x.dtype == cdt else x.astype(cdt)
    else:
        xp = jnp.zeros((B, T, d_model_p), cdt).at[:, :, :d_model].set(x.astype(cdt))

    kernel = functools.partial(_ffn_kernel, T=T, T_out=T_out, stride=stride,
                               n_ff=n_ff, h_off=_H_OFF)

    scratch = [pltpu.VMEM((Bb, T_halo, t_ff), cdt)]
    if n_ff > 1:
        scratch.append(pltpu.VMEM((Bb * T_out, d_model_p), jnp.float32))

    out = pl.pallas_call(
        kernel,
        out_shape=jax.ShapeDtypeStruct((B, T_out, d_model_p), out_dtype),
        grid_spec=pltpu.PrefetchScalarGridSpec(
            num_scalar_prefetch=0,
            grid=(B // Bb, n_ff),
            in_specs=[
                pl.BlockSpec((Bb, T, d_model_p), lambda b, k: (b, 0, 0)),
                pl.BlockSpec((d_model_p, t_ff), lambda b, k: (0, k)),
                pl.BlockSpec((1, t_ff), lambda b, k: (0, k)),
                pl.BlockSpec((3, t_ff, d_model_p), lambda b, k: (0, k, 0)),
                pl.BlockSpec((1, d_model_p), lambda b, k: (0, 0)),
            ],
            out_specs=pl.BlockSpec((Bb, T_out, d_model_p), lambda b, k: (b, 0, 0)),
            scratch_shapes=scratch,
        ),
        compiler_params=pltpu.CompilerParams(
            dimension_semantics=("parallel", "arbitrary"),
            vmem_limit_bytes=vmem_limit,
        ),
    )(xp, W1, b1, W2, b2)
    return out if d_model_p == d_model else out[:, :, :d_model]


def _reference(x, w1_weight, w1_bias, w2_weight, w2_bias, *, stride):
    """Pure-JAX reference mirroring the PyTorch forward (eval mode)."""
    xc = jnp.transpose(x, (0, 2, 1))  # (B, d_model, T) == x.permute(0,2,1)
    h = lax.conv_general_dilated(
        xc, w1_weight, window_strides=(1,), padding=((0, 0),),
        dimension_numbers=("NCH", "OIH", "NCH"))
    h = h + w1_bias[None, :, None]
    h = jnp.maximum(h, 0.0)
    y = lax.conv_general_dilated(
        h, w2_weight, window_strides=(stride,), padding=((1, 1),),
        dimension_numbers=("NCH", "OIH", "NCH"))
    y = y + w2_bias[None, :, None]
    return jnp.transpose(y, (0, 2, 1))  # (B, T_out, d_model)


if __name__ == "__main__":
    def make(Bv, Tv, dm, dff, k):
        ks = jax.random.split(k, 5)
        xv = jax.random.normal(ks[0], (Bv, Tv, dm), jnp.float32)
        w1w = jax.random.normal(ks[1], (dff, dm, 1), jnp.float32) * 0.1
        w1b = jax.random.normal(ks[2], (dff,), jnp.float32) * 0.1
        w2w = jax.random.normal(ks[3], (dm, dff, 3), jnp.float32) * 0.1
        w2b = jax.random.normal(ks[4], (dm,), jnp.float32) * 0.1
        return xv, w1w, w1b, w2w, w2b

    # Config 1: module-sized shapes, every stride the encoder uses (n_ff == 1 path).
    x, w1w, w1b, w2w, w2b = make(2, 8, 4, 32, jax.random.PRNGKey(0))
    for stride in (1, 2, 3):
        out = positionwise_feed_forward(x, w1w, w1b, w2w, w2b, stride=stride)
        out = jax.block_until_ready(out)
        ref = _reference(x, w1w, w1b, w2w, w2b, stride=stride)
        assert out.shape == ref.shape, (stride, out.shape, ref.shape)
        assert jnp.allclose(out, ref, atol=1e-4, rtol=1e-4), \
            f"mismatch vs reference (f32, stride={stride})"

    # Config 2: batch-tiled + multi-slab accumulator path (Bb=2, n_ff=2).
    x2, w1w2, w1b2, w2w2, w2b2 = make(4, 16, 8, 256, jax.random.PRNGKey(1))
    out = positionwise_feed_forward(x2, w1w2, w1b2, w2w2, w2b2, stride=2,
                                    t_ff_max=128)
    out = jax.block_until_ready(out)
    ref = _reference(x2, w1w2, w1b2, w2w2, w2b2, stride=2)
    assert out.shape == ref.shape, (out.shape, ref.shape)
    assert jnp.allclose(out, ref, atol=1e-4, rtol=1e-4), "mismatch (f32 multi-slab)"

    # Config 3: bf16 MXU-input path (recommended on v5e/v6e/v7x), looser tolerance.
    out_bf16 = positionwise_feed_forward(x, w1w, w1b, w2w, w2b, stride=2,
                                         compute_dtype=jnp.bfloat16)
    out_bf16 = jax.block_until_ready(out_bf16)
    ref = _reference(x, w1w, w1b, w2w, w2b, stride=2)
    assert out_bf16.shape == ref.shape, (out_bf16.shape, ref.shape)
    assert jnp.allclose(out_bf16, ref, atol=5e-2, rtol=5e-2), "mismatch (bf16)"

    print("KERNEL_OK")
</pallas_src>

<mosaic_0001>
module attributes {stable_mosaic.version = 11 : i64} {
  func.func @_ffn_kernel(%arg0: i32, %arg1: i32, %arg2: memref<1x8x128xf32, #tpu.memory_space<vmem>>, %arg3: memref<128x128xf32, #tpu.memory_space<vmem>>, %arg4: memref<1x128xf32, #tpu.memory_space<vmem>>, %arg5: memref<3x128x128xf32, #tpu.memory_space<vmem>>, %arg6: memref<1x128xf32, #tpu.memory_space<vmem>>, %arg7: memref<1x8x128xf32, #tpu.memory_space<vmem>>, %arg8: memref<1x24x128xf32, #tpu.memory_space<vmem>>) attributes {dimension_semantics = [#tpu.dimension_semantics<parallel>, #tpu.dimension_semantics<arbitrary>], iteration_bounds = array<i64: 2, 1>, scalar_prefetch = 0 : i64, scratch_operands = 1 : i64, tpu.core_type = #tpu.core_type<tc>, window_params = [{transform_indices = @transform_0, window_bounds = array<i64: 1, 8, 128>}, {transform_indices = @transform_1, window_bounds = array<i64: 128, 128>}, {transform_indices = @transform_2, window_bounds = array<i64: 1, 128>}, {transform_indices = @transform_3, window_bounds = array<i64: 3, 128, 128>}, {pipeline_mode = #tpu.pipeline_mode<synchronous>, transform_indices = @transform_4, window_bounds = array<i64: 1, 128>}, {transform_indices = @transform_5, window_bounds = array<i64: 1, 8, 128>}]} {
    %c0_i32 = arith.constant 0 : i32
    %0 = arith.cmpi eq, %arg1, %c0_i32 : i32
    %1 = arith.extui %0 : i1 to i32
    %c0_i32_0 = arith.constant 0 : i32
    %2 = arith.cmpi ne, %1, %c0_i32_0 : i32
    scf.if %2 {
      %cst_32 = arith.constant 0.000000e+00 : f32
      %36 = vector.broadcast %cst_32 : f32 to vector<1x8x128xf32>
      %c0_33 = arith.constant 0 : index
      %c0_34 = arith.constant 0 : index
      %c0_35 = arith.constant 0 : index
      %37 = vector.load %arg8[%c0_33, %c0_34, %c0_35] : memref<1x24x128xf32, #tpu.memory_space<vmem>>, vector<1x8x128xf32>
      tpu.vector_store %arg8[%c0_33, %c0_34, %c0_35], %36 {strides = array<i32>} : memref<1x24x128xf32, #tpu.memory_space<vmem>>, vector<1x8x128xf32>,
      %cst_36 = arith.constant 0.000000e+00 : f32
      %38 = vector.broadcast %cst_36 : f32 to vector<1x8x128xf32>
      %c0_37 = arith.constant 0 : index
      %c16 = arith.constant 16 : index
      %c0_38 = arith.constant 0 : index
      %39 = vector.load %arg8[%c0_37, %c16, %c0_38] : memref<1x24x128xf32, #tpu.memory_space<vmem>>, vector<1x8x128xf32>
      tpu.vector_store %arg8[%c0_37, %c16, %c0_38], %38 {strides = array<i32>} : memref<1x24x128xf32, #tpu.memory_space<vmem>>, vector<1x8x128xf32>,
    } else {
    }
    %c0 = arith.constant 0 : index
    %c0_1 = arith.constant 0 : index
    %c0_2 = arith.constant 0 : index
    %3 = vector.load %arg2[%c0, %c0_1, %c0_2] : memref<1x8x128xf32, #tpu.memory_space<vmem>>, vector<1x8x128xf32>
    %4 = vector.shape_cast %3 : vector<1x8x128xf32> to vector<8x128xf32>
    %c0_3 = arith.constant 0 : index
    %c0_4 = arith.constant 0 : index
    %5 = vector.load %arg3[%c0_3, %c0_4] : memref<128x128xf32, #tpu.memory_space<vmem>>, vector<128x128xf32>
    %cst = arith.constant dense<0.000000e+00> : vector<8x128xf32>
    %6 = tpu.matmul %4, %5, %cst {dimension_numbers = #tpu.dot_dimension_numbers<[1], [0], [0], [1], [0, 0, 1, 1], [], []>} : vector<8x128xf32>, vector<128x128xf32>, vector<8x128xf32> -> vector<8x128xf32>
    %c0_5 = arith.constant 0 : index
    %c0_6 = arith.constant 0 : index
    %7 = vector.load %arg4[%c0_5, %c0_6] : memref<1x128xf32, #tpu.memory_space<vmem>>, vector<1x128xf32>
    %8 = vector.broadcast %7 : vector<1x128xf32> to vector<8x128xf32>
    %9 = arith.addf %6, %8 : vector<8x128xf32>
    %cst_7 = arith.constant 0.000000e+00 : f32
    %10 = vector.broadcast %cst_7 : f32 to vector<8x128xf32>
    %11 = arith.maximumf %9, %10 : vector<8x128xf32>
    %12 = vector.shape_cast %11 : vector<8x128xf32> to vector<1x8x128xf32>
    %c0_8 = arith.constant 0 : index
    %c8 = arith.constant 8 : index
    %c0_9 = arith.constant 0 : index
    %13 = vector.load %arg8[%c0_8, %c8, %c0_9] : memref<1x24x128xf32, #tpu.memory_space<vmem>>, vector<1x8x128xf32>
    tpu.vector_store %arg8[%c0_8, %c8, %c0_9], %12 {strides = array<i32>} : memref<1x24x128xf32, #tpu.memory_space<vmem>>, vector<1x8x128xf32>,
    %c0_10 = arith.constant 0 : index
    %c7 = arith.constant 7 : index
    %c0_11 = arith.constant 0 : index
    %14 = vector.load %arg8[%c0_10, %c7, %c0_11] : memref<1x24x128xf32, #tpu.memory_space<vmem>>, vector<1x8x128xf32>
    %15 = vector.shape_cast %14 : vector<1x8x128xf32> to vector<8x128xf32>
    %c0_12 = arith.constant 0 : index
    %c0_13 = arith.constant 0 : index
    %c0_14 = arith.constant 0 : index
    %16 = vector.load %arg5[%c0_12, %c0_13, %c0_14] : memref<3x128x128xf32, #tpu.memory_space<vmem>>, vector<1x128x128xf32>
    %17 = vector.shape_cast %16 : vector<1x128x128xf32> to vector<128x128xf32>
    %cst_15 = arith.constant dense<0.000000e+00> : vector<8x128xf32>
    %18 = tpu.matmul %15, %17, %cst_15 {dimension_numbers = #tpu.dot_dimension_numbers<[1], [0], [0], [1], [0, 0, 1, 1], [], []>} : vector<8x128xf32>, vector<128x128xf32>, vector<8x128xf32> -> vector<8x128xf32>
    %c0_16 = arith.constant 0 : index
    %c8_17 = arith.constant 8 : index
    %c0_18 = arith.constant 0 : index
    %19 = vector.load %arg8[%c0_16, %c8_17, %c0_18] : memref<1x24x128xf32, #tpu.memory_space<vmem>>, vector<1x8x128xf32>
    %20 = vector.shape_cast %19 : vector<1x8x128xf32> to vector<8x128xf32>
    %c1 = arith.constant 1 : index
    %c0_19 = arith.constant 0 : index
    %c0_20 = arith.constant 0 : index
    %21 = vector.load %arg5[%c1, %c0_19, %c0_20] : memref<3x128x128xf32, #tpu.memory_space<vmem>>, vector<1x128x128xf32>
    %22 = vector.shape_cast %21 : vector<1x128x128xf32> to vector<128x128xf32>
    %cst_21 = arith.constant dense<0.000000e+00> : vector<8x128xf32>
    %23 = tpu.matmul %20, %22, %cst_21 {dimension_numbers = #tpu.dot_dimension_numbers<[1], [0], [0], [1], [0, 0, 1, 1], [], []>} : vector<8x128xf32>, vector<128x128xf32>, vector<8x128xf32> -> vector<8x128xf32>
    %24 = arith.addf %18, %23 : vector<8x128xf32>
    %c0_22 = arith.constant 0 : index
    %c9 = arith.constant 9 : index
    %c0_23 = arith.constant 0 : index
    %25 = vector.load %arg8[%c0_22, %c9, %c0_23] : memref<1x24x128xf32, #tpu.memory_space<vmem>>, vector<1x8x128xf32>
    %26 = vector.shape_cast %25 : vector<1x8x128xf32> to vector<8x128xf32>
    %c2 = arith.constant 2 : index
    %c0_24 = arith.constant 0 : index
    %c0_25 = arith.constant 0 : index
    %27 = vector.load %arg5[%c2, %c0_24, %c0_25] : memref<3x128x128xf32, #tpu.memory_space<vmem>>, vector<1x128x128xf32>
    %28 = vector.shape_cast %27 : vector<1x128x128xf32> to vector<128x128xf32>
    %cst_26 = arith.constant dense<0.000000e+00> : vector<8x128xf32>
    %29 = tpu.matmul %26, %28, %cst_26 {dimension_numbers = #tpu.dot_dimension_numbers<[1], [0], [0], [1], [0, 0, 1, 1], [], []>} : vector<8x128xf32>, vector<128x128xf32>, vector<8x128xf32> -> vector<8x128xf32>
    %30 = arith.addf %24, %29 : vector<8x128xf32>
    %c0_27 = arith.constant 0 : index
    %c0_28 = arith.constant 0 : index
    %31 = vector.load %arg6[%c0_27, %c0_28] : memref<1x128xf32, #tpu.memory_space<vmem>>, vector<1x128xf32>
    %32 = vector.broadcast %31 : vector<1x128xf32> to vector<8x128xf32>
    %33 = arith.addf %30, %32 : vector<8x128xf32>
    %34 = vector.shape_cast %33 : vector<8x128xf32> to vector<1x8x128xf32>
    %c0_29 = arith.constant 0 : index
    %c0_30 = arith.constant 0 : index
    %c0_31 = arith.constant 0 : index
    %35 = vector.load %arg7[%c0_29, %c0_30, %c0_31] : memref<1x8x128xf32, #tpu.memory_space<vmem>>, vector<1x8x128xf32>
    tpu.vector_store %arg7[%c0_29, %c0_30, %c0_31], %34 {strides = array<i32>} : memref<1x8x128xf32, #tpu.memory_space<vmem>>, vector<1x8x128xf32>,
    return
  }
  func.func @transform_0(%arg0: i32, %arg1: i32) -> (i32, i32, i32) {
    %c0_i32 = arith.constant 0 : i32
    %c0_i32_0 = arith.constant 0 : i32
    %c0_i32_1 = arith.constant 0 : i32
    return %arg0, %c0_i32, %c0_i32_0 : i32, i32, i32
  }
  func.func @transform_1(%arg0: i32, %arg1: i32) -> (i32, i32) {
    %c0_i32 = arith.constant 0 : i32
    %c0_i32_0 = arith.constant 0 : i32
    return %c0_i32, %arg1 : i32, i32
  }
  func.func @transform_2(%arg0: i32, %arg1: i32) -> (i32, i32) {
    %c0_i32 = arith.constant 0 : i32
    %c0_i32_0 = arith.constant 0 : i32
    return %c0_i32, %arg1 : i32, i32
  }
  func.func @transform_3(%arg0: i32, %arg1: i32) -> (i32, i32, i32) {
    %c0_i32 = arith.constant 0 : i32
    %c0_i32_0 = arith.constant 0 : i32
    %c0_i32_1 = arith.constant 0 : i32
    return %c0_i32, %arg1, %c0_i32_0 : i32, i32, i32
  }
  func.func @transform_4(%arg0: i32, %arg1: i32) -> (i32, i32) {
    %c0_i32 = arith.constant 0 : i32
    %c0_i32_0 = arith.constant 0 : i32
    %c0_i32_1 = arith.constant 0 : i32
    return %c0_i32, %c0_i32_0 : i32, i32
  }
  func.func @transform_5(%arg0: i32, %arg1: i32) -> (i32, i32, i32) {
    %c0_i32 = arith.constant 0 : i32
    %c0_i32_0 = arith.constant 0 : i32
    %c0_i32_1 = arith.constant 0 : i32
    return %arg0, %c0_i32, %c0_i32_0 : i32, i32, i32
  }
}

</mosaic_0001>

<llo_original>
// kernel: tpu_custom_call.1
$region0: #{tpu_custom_call.1}
  #allocation0 [shape = 'u32[]', space=smem, size = 0x4, offset = 0x4, fixed_abs, tag = 'smem constant byte address 0x4 - core index']
  #allocation1 [shape = 'u32[144,128]{1,0:T(1,128)}', space=vmem, size = 0x12000, scoped, tag = 'internal scratch']
  #allocation2 [shape = 'f32[1,24,128]{2,1,0:T(8,128)}', space=vmem, size = 0x3000, scoped, tag = 'scratch operand']
  %s0 = inlined_call_operand.hbm [shape: f32[2,8,128], index: 0, kind: input, shape index: {}]
  %s1 = inlined_call_operand.hbm [shape: f32[128,128], index: 1, kind: input, shape index: {}]
  %s2 = inlined_call_operand.vmem [shape: f32[1,128], index: 2, kind: input, shape index: {}]
  %s3 = inlined_call_operand.hbm [shape: f32[3,128,128], index: 3, kind: input, shape index: {}]
  %s4 = inlined_call_operand.vmem [shape: f32[1,128], index: 4, kind: input, shape index: {}]
  %s5 = inlined_call_operand.hbm [shape: f32[2,8,128], index: 5, kind: output, shape index: {}]
  %s6 = sld [smem:[#allocation0]]
  $region69: #{tpu_custom_call.1} parent=0
    _
  %s8 = ssub.s32 1, %s6
  %s9 = scalar_select 0, %s8, %s6
  $region1: #{tpu_custom_call.1} parent=0
    #allocation3 [shape = 'u8[8192]{0}', space=vmem, size = 0x2000, scoped, tag = 'input window, operand 0']
    #allocation4 [shape = 's32[2]{0}', space=sflag, size = 0x8, scoped, tag = 'scoped memory for tpu_custom_call.1']
    #allocation5 [shape = 's32[2]{0}', space=sflag, size = 0x8, scoped, tag = 'scoped memory for tpu_custom_call.1']
    #allocation6 [shape = 'u8[65536]{0}', space=vmem, size = 0x10000, scoped, tag = 'input window, operand 1, single buffered']
    #allocation7 [shape = 's32[1]{0}', space=sflag, size = 0x4, scoped, tag = 'scoped memory for tpu_custom_call.1']
    #allocation8 [shape = 'u8[196608]{0}', space=vmem, size = 0x30000, scoped, tag = 'input window, operand 3, single buffered']
    #allocation9 [shape = 'u8[8192]{0}', space=vmem, size = 0x2000, scoped, tag = 'output window, operand 0']
    %10 = vsyncpa [#allocation4], 0
    %s11 = scalar_lea.sflag [#allocation4], 1
    %12 = vsyncpa %s11, 0
    %13 = vsyncpa [#allocation7], 0
    %14 = vsyncpa [#allocation5], 0
    %s15 = scalar_lea.sflag [#allocation5], 1
    %16 = vsyncpa %s15, 0
    loop: start=0, step=1, limit=4
    $region2: #{tpu_custom_call.1} parent=1 // loop_pre_header
      _
    $region3: #{tpu_custom_call.1} parent=1 // loop_header
      %s18 = sphi 0, %s22
      %p19 = scmp.ge.s32.totalorder %s18, 4
      %s25 = sphi 0, %s37
      %s26 = sphi 0, %s33
      %s27 = sphi 0, %s25
      %s28 = sphi 0, %s26
      %s29 = sphi 0, %s27
      %s30 = sphi 0, %s28
      %s40 = sphi 0, %s42
      %s43 = sphi 0, %s40
      %s44 = sphi 0, %s43
      %s60 = sphi 0, %s44
      %s66 = sphi 0, %s68
      %s69 = sphi 0, %s66
      %s70 = sphi 0, %s69
      %s86 = sphi 0, %s70
      %s92 = sphi 0, %s94
      %s95 = sphi 0, %s92
      %s96 = sphi 0, %s95
      %s112 = sphi 0, %s96
      %s118 = sphi 0, %s120
      %s121 = sphi 0, %s118
      %s122 = sphi 0, %s121
      %s138 = sphi 0, %s122
      %s142 = sphi 0, %s142
      %s144 = sphi 0, %s142
      %s145 = sphi 0, %s144
      %s159 = sphi 0, %s145
      %s165 = sphi 0, %s167
      %s168 = sphi 0, %s165
      %s169 = sphi 0, %s168
      %s185 = sphi 0, %s169
    $region4: #{tpu_custom_call.1} parent=1 // loop_header_branch
      %21 = sbr.rel (%p19) target = $region8
    $region5: #{tpu_custom_call.1} parent=1 // loop_body
      %s23 = ssub.s32 %s18, 1
      %s24 = ssub.s32 %s18, 2
      %s31 = sadd.s32 1, %s26
      %p32 = scmp.ge.s32.totalorder %s31, 1
      %s33 = scalar_select %p32, 0, %s31
      %s34 = sadd.s32 1, %s25
      %s35 = scalar_select %p32, %s34, %s25
      %p36 = scmp.ge.s32.totalorder %s35, 2
      %s37 = scalar_select %p36, 0, %s35
      %s38 = ssub.s32 %s25, %s37
      %p39 = scmp.eq.s32.totalorder %s38, 0
      %s41 = sadd.s32 %s40, 1
      %s42 = scalar_select %p39, %s40, %s41
      %p45 = pneg %p39
      %p46 = scmp.eq.s32.totalorder %s18, 1
      %p47 = por %p45, %p46
      %p48 = scmp.ne.s32.totalorder %s40, %s43
      %p49 = scmp.eq.s32.totalorder %s18, 0
      %p50 = por %p48, %p49
      %p51 = scmp.ne.s32.totalorder %s40, %s43
      %p52 = scmp.eq.s32.totalorder %s23, 1
      %p53 = por %p51, %p52
      %p54 = scmp.ne.s32.totalorder %s43, %s44
      %p55 = scmp.eq.s32.totalorder %s23, 0
      %p56 = por %p54, %p55
      %p57 = scmp.ne.s32.totalorder %s43, %s44
      %p58 = scmp.eq.s32.totalorder %s24, 1
      %p59 = por %p57, %p58
      %p61 = scmp.ne.s32.totalorder %s44, %s60
      %p62 = scmp.eq.s32.totalorder %s24, 0
      %p63 = por %p61, %p62
      %s64 = ssub.s32 %s26, %s33
      %p65 = scmp.eq.s32.totalorder %s64, 0
      %s67 = sadd.s32 %s66, 1
      %s68 = scalar_select %p65, %s66, %s67
      %p71 = pneg %p65
      %p72 = scmp.eq.s32.totalorder %s18, 1
      %p73 = por %p71, %p72
      %p74 = scmp.ne.s32.totalorder %s66, %s69
      %p75 = scmp.eq.s32.totalorder %s18, 0
      %p76 = por %p74, %p75
      %p77 = scmp.ne.s32.totalorder %s66, %s69
      %p78 = scmp.eq.s32.totalorder %s23, 1
      %p79 = por %p77, %p78
      %p80 = scmp.ne.s32.totalorder %s69, %s70
      %p81 = scmp.eq.s32.totalorder %s23, 0
      %p82 = por %p80, %p81
      %p83 = scmp.ne.s32.totalorder %s69, %s70
      %p84 = scmp.eq.s32.totalorder %s24, 1
      %p85 = por %p83, %p84
      %p87 = scmp.ne.s32.totalorder %s70, %s86
      %p88 = scmp.eq.s32.totalorder %s24, 0
      %p89 = por %p87, %p88
      %s90 = ssub.s32 %s26, %s33
      %p91 = scmp.eq.s32.totalorder %s90, 0
      %s93 = sadd.s32 %s92, 1
      %s94 = scalar_select %p91, %s92, %s93
      %p97 = pneg %p91
      %p98 = scmp.eq.s32.totalorder %s18, 1
      %p99 = por %p97, %p98
      %p100 = scmp.ne.s32.totalorder %s92, %s95
      %p101 = scmp.eq.s32.totalorder %s18, 0
      %p102 = por %p100, %p101
      %p103 = scmp.ne.s32.totalorder %s92, %s95
      %p104 = scmp.eq.s32.totalorder %s23, 1
      %p105 = por %p103, %p104
      %p106 = scmp.ne.s32.totalorder %s95, %s96
      %p107 = scmp.eq.s32.totalorder %s23, 0
      %p108 = por %p106, %p107
      %p109 = scmp.ne.s32.totalorder %s95, %s96
      %p110 = scmp.eq.s32.totalorder %s24, 1
      %p111 = por %p109, %p110
      %p113 = scmp.ne.s32.totalorder %s96, %s112
      %p114 = scmp.eq.s32.totalorder %s24, 0
      %p115 = por %p113, %p114
      %s116 = ssub.s32 %s26, %s33
      %p117 = scmp.eq.s32.totalorder %s116, 0
      %s119 = sadd.s32 %s118, 1
      %s120 = scalar_select %p117, %s118, %s119
      %p123 = pneg %p117
      %p124 = scmp.eq.s32.totalorder %s18, 1
      %p125 = por %p123, %p124
      %p126 = scmp.ne.s32.totalorder %s118, %s121
      %p127 = scmp.eq.s32.totalorder %s18, 0
      %p128 = por %p126, %p127
      %p129 = scmp.ne.s32.totalorder %s118, %s121
      %p130 = scmp.eq.s32.totalorder %s23, 1
      %p131 = por %p129, %p130
      %p132 = scmp.ne.s32.totalorder %s121, %s122
      %p133 = scmp.eq.s32.totalorder %s23, 0
      %p134 = por %p132, %p133
      %p135 = scmp.ne.s32.totalorder %s121, %s122
      %p136 = scmp.eq.s32.totalorder %s24, 1
      %p137 = por %p135, %p136
      %p139 = scmp.ne.s32.totalorder %s122, %s138
      %p140 = scmp.eq.s32.totalorder %s24, 0
      %p141 = por %p139, %p140
      %s143 = sadd.s32 %s142, 1
      %p146 = scmp.eq.s32.totalorder %s18, 1
      %p147 = scmp.ne.s32.totalorder %s142, %s144
      %p148 = scmp.eq.s32.totalorder %s18, 0
      %p149 = por %p147, %p148
      %p150 = scmp.ne.s32.totalorder %s142, %s144
      %p151 = scmp.eq.s32.totalorder %s23, 1
      %p152 = por %p150, %p151
      %p153 = scmp.ne.s32.totalorder %s144, %s145
      %p154 = scmp.eq.s32.totalorder %s23, 0
      %p155 = por %p153, %p154
      %p156 = scmp.ne.s32.totalorder %s144, %s145
      %p157 = scmp.eq.s32.totalorder %s24, 1
      %p158 = por %p156, %p157
      %p160 = scmp.ne.s32.totalorder %s145, %s159
      %p161 = scmp.eq.s32.totalorder %s24, 0
      %p162 = por %p160, %p161
      %s163 = ssub.s32 %s25, %s37
      %p164 = scmp.eq.s32.totalorder %s163, 0
      %s166 = sadd.s32 %s165, 1
      %s167 = scalar_select %p164, %s165, %s166
      %p170 = pneg %p164
      %p171 = scmp.eq.s32.totalorder %s18, 1
      %p172 = por %p170, %p171
      %p173 = scmp.ne.s32.totalorder %s165, %s168
      %p174 = scmp.eq.s32.totalorder %s18, 0
      %p175 = por %p173, %p174
      %p176 = scmp.ne.s32.totalorder %s165, %s168
      %p177 = scmp.eq.s32.totalorder %s23, 1
      %p178 = por %p176, %p177
      %p179 = scmp.ne.s32.totalorder %s168, %s169
      %p180 = scmp.eq.s32.totalorder %s23, 0
      %p181 = por %p179, %p180
      %p182 = scmp.ne.s32.totalorder %s168, %s169
      %p183 = scmp.eq.s32.totalorder %s24, 1
      %p184 = por %p182, %p183
      %p186 = scmp.ne.s32.totalorder %s169, %s185
      %p187 = scmp.eq.s32.totalorder %s24, 0
      %p188 = por %p186, %p187
      %p189 = scmp.le.s32.totalorder 1, %s18
      %p190 = scmp.lt.s32.totalorder %s18, 3
      %p191 = pnand %p189, %p190
      %p192 = pneg %p191
      // Predicated region
      $region9: #{tpu_custom_call.1} parent=5 // pred_check
        _
      $region10: #{tpu_custom_call.1} parent=5 // pred_check_branch
        %194 = sbr.rel (%p191) target = $region12
      $region11: #{tpu_custom_call.1} parent=5 // pred_region
        %s195 = ssub.s32 %s18, 1
        // Predicated region
        $region13: #{tpu_custom_call.1} parent=11 // pred_check
          %p196 = pneg %p82
        $region14: #{tpu_custom_call.1} parent=11 // pred_check_branch
          %198 = sbr.rel (%p196) target = $region16
        $region15: #{tpu_custom_call.1} parent=11 // pred_region
          %s200 = ssub.s32 2048, 2048
          %201 = vsyncadd [#allocation7], %s200
          %s202 = smul.addr %s28, 128
          %s203 = scalar_lea.hbm %s1, %s202
          %s204 = sshll.u32 [#allocation6], 4
          %s205 = int_to_ptr.vmem [resolvable:$true] %s204
          %210 = dma.hbm_to_vmem [thread:$0]  %s203, 2048, %s205, [#allocation7], 128, 128, 8
        $region16: #{tpu_custom_call.1} parent=11 // pred_fallthru
          _
        // Predicated region
        $region17: #{tpu_custom_call.1} parent=11 // pred_check
          %p211 = pneg %p108
        $region18: #{tpu_custom_call.1} parent=11 // pred_check_branch
          %213 = sbr.rel (%p211) target = $region20
        $region19: #{tpu_custom_call.1} parent=11 // pred_region
          %p214 = scmp.lt.s32.totalorder %s28, 0
          %s215 = scalar_select %p214, %s28, 0
          %s216 = scalar_lea.vmem %s2, %s215
        $region20: #{tpu_custom_call.1} parent=11 // pred_fallthru
          _
        // Predicated region
        $region21: #{tpu_custom_call.1} parent=11 // pred_check
          %p217 = pneg %p134
        $region22: #{tpu_custom_call.1} parent=11 // pred_check_branch
          %219 = sbr.rel (%p217) target = $region24
        $region23: #{tpu_custom_call.1} parent=11 // pred_region
          %s220 = smul.u32 16, %s28
          %s222 = ssub.s32 6144, 6144
          %223 = vsyncadd [#allocation7], %s222
          %s224 = smul.addr %s220, 128
          %s225 = scalar_lea.hbm %s3, %s224
          %s226 = sshll.u32 [#allocation8], 4
          %s227 = int_to_ptr.vmem [resolvable:$true] %s226
          %232 = dma.hbm_to_vmem [thread:$0]  %s225, 6144, %s227, [#allocation7], 128, 128, 8
        $region24: #{tpu_custom_call.1} parent=11 // pred_fallthru
          _
        // Predicated region
        $region25: #{tpu_custom_call.1} parent=11 // pred_check
          %p233 = pneg %p155
        $region26: #{tpu_custom_call.1} parent=11 // pred_check_branch
          %235 = sbr.rel (%p233) target = $region28
        $region27: #{tpu_custom_call.1} parent=11 // pred_region
          _
        $region28: #{tpu_custom_call.1} parent=11 // pred_fallthru
          _
      $region12: #{tpu_custom_call.1} parent=5 // pred_fallthru
        _
      %p236 = scmp.lt.s32.totalorder %s18, 2
      // Predicated region
      $region29: #{tpu_custom_call.1} parent=5 // pred_check
        %p237 = pneg %p236
      $region30: #{tpu_custom_call.1} parent=5 // pred_check_branch
        %239 = sbr.rel (%p237) target = $region32
      $region31: #{tpu_custom_call.1} parent=5 // pred_region
        // Predicated region
        $region33: #{tpu_custom_call.1} parent=31 // pred_check
          %p240 = pneg %p50
        $region34: #{tpu_custom_call.1} parent=31 // pred_check_branch
          %242 = sbr.rel (%p240) target = $region36
        $region35: #{tpu_custom_call.1} parent=31 // pred_region
          %s243 = sand.u32 %s40, 1
          %s244 = scalar_lea.sflag [#allocation4], %s243
          %s245 = sand.u32 %s40, 1
          %s246 = smul.addr %s245, 8
          %s247 = scalar_lea.vmem [#allocation3], %s246
          %s249 = ssub.s32 128, 128
          %250 = vsyncadd %s244, %s249
          %s251 = smul.addr %s25, 128
          %s252 = scalar_lea.hbm %s0, %s251
          %s254 = sshll.u32 %s247, 4
          %s255 = int_to_ptr.vmem [resolvable:$true] %s254
          %257 = dma.hbm_to_vmem [thread:$0]  %s252, 128, %s255, %s244
        $region36: #{tpu_custom_call.1} parent=31 // pred_fallthru
          _
      $region32: #{tpu_custom_call.1} parent=5 // pred_fallthru
        _
      %p258 = scmp.le.s32.totalorder 1, %s18
      %p259 = scmp.lt.s32.totalorder %s18, 3
      %p260 = pnand %p258, %p259
      %p261 = pneg %p260
      // Predicated region
      $region37: #{tpu_custom_call.1} parent=5 // pred_check
        _
      $region38: #{tpu_custom_call.1} parent=5 // pred_check_branch
        %263 = sbr.rel (%p260) target = $region40
      $region39: #{tpu_custom_call.1} parent=5 // pred_region
        %s264 = ssub.s32 %s18, 1
        %s265 = sand.u32 %s43, 1
        %s266 = scalar_lea.sflag [#allocation4], %s265
        %s267 = sand.u32 %s43, 1
        %s268 = smul.addr %s267, 8
        %s269 = scalar_lea.vmem [#allocation3], %s268
        // Predicated region
        $region41: #{tpu_custom_call.1} parent=39 // pred_check
          %p270 = pneg %p56
        $region42: #{tpu_custom_call.1} parent=39 // pred_check_branch
          %272 = sbr.rel (%p270) target = $region44
        $region43: #{tpu_custom_call.1} parent=39 // pred_region
          %273 = dma.done %s266, 128
        $region44: #{tpu_custom_call.1} parent=39 // pred_fallthru
          _
        // Predicated region
        $region45: #{tpu_custom_call.1} parent=39 // pred_check
          %p274 = pneg %p82
        $region46: #{tpu_custom_call.1} parent=39 // pred_check_branch
          %276 = sbr.rel (%p274) target = $region48
        $region47: #{tpu_custom_call.1} parent=39 // pred_region
          %277 = dma.done [#allocation7], 2048
        $region48: #{tpu_custom_call.1} parent=39 // pred_fallthru
          _
        // Predicated region
        $region49: #{tpu_custom_call.1} parent=39 // pred_check
          %p278 = pneg %p134
        $region50: #{tpu_custom_call.1} parent=39 // pred_check_branch
          %280 = sbr.rel (%p278) target = $region52
        $region51: #{tpu_custom_call.1} parent=39 // pred_region
          %281 = dma.done [#allocation7], 6144
        $region52: #{tpu_custom_call.1} parent=39 // pred_fallthru
          _
        %s282 = sand.u32 %s43, 1
        %s283 = scalar_lea.sflag [#allocation4], %s282
        %s284 = sand.u32 %s43, 1
        %s285 = smul.addr %s284, 8
        %s286 = scalar_lea.vmem [#allocation3], %s285
        %p287 = pneg %p56
        %p288 = pneg %p53
        %p289 = pneg %p82
        %p290 = pneg %p79
        %p291 = scmp.lt.s32.totalorder %s28, 0
        %s292 = scalar_select %p291, %s28, 0
        %s293 = scalar_lea.vmem %s2, %s292
        %p294 = pneg %p108
        %p295 = pneg %p105
        %p296 = pneg %p134
        %p297 = pneg %p131
        %p298 = pneg %p155
        %p299 = pneg %p152
        %p300 = pneg %p181
        %p301 = pneg %p178
        %s302 = sand.u32 %s168, 1
        %s303 = scalar_lea.sflag [#allocation5], %s302
        %s304 = sand.u32 %s168, 1
        %s305 = smul.addr %s304, 8
        %s306 = scalar_lea.vmem [#allocation9], %s305
        %p307 = scmp.lt.s32.totalorder %s28, 0
        %s308 = scalar_select %p307, %s28, 0
        %s309 = scalar_lea.vmem %s2, %s308
        %s310 = smul.u32 16, %s28
        %p311 = scmp.eq.s32.totalorder %s28, 0
        // Predicated region
        $region53: #{tpu_custom_call.1} parent=39 // pred_check
          %p312 = pneg %p311
        $region54: #{tpu_custom_call.1} parent=39 // pred_check_branch
          %314 = sbr.rel (%p312) target = $region56
        $region55: #{tpu_custom_call.1} parent=39 // pred_region
          %315 = vst [vmem:[#allocation2] sm:$0xff] 0.0
          %316 = vst [vmem:[#allocation2 + $0x10] sm:$0xff] 0.0
        $region56: #{tpu_custom_call.1} parent=39 // pred_fallthru
          _
        %v317 = vld [vmem:[%s269] sm:$0xff]
        %v318 = vld [vmem:[#allocation6] sm:$0xff]
        %v319 = vld [vmem:[#allocation6 + $0x8] sm:$0xff]
        %v320 = vld [vmem:[#allocation6 + $0x10] sm:$0xff]
        %v321 = vld [vmem:[#allocation6 + $0x18] sm:$0xff]
        %v322 = vld [vmem:[#allocation6 + $0x20] sm:$0xff]
        %v323 = vld [vmem:[#allocation6 + $0x28] sm:$0xff]
        %v324 = vld [vmem:[#allocation6 + $0x30] sm:$0xff]
        %v325 = vld [vmem:[#allocation6 + $0x38] sm:$0xff]
        %v326 = vld [vmem:[#allocation6 + $0x40] sm:$0xff]
        %v327 = vld [vmem:[#allocation6 + $0x48] sm:$0xff]
        %v328 = vld [vmem:[#allocation6 + $0x50] sm:$0xff]
        %v329 = vld [vmem:[#allocation6 + $0x58] sm:$0xff]
        %v330 = vld [vmem:[#allocation6 + $0x60] sm:$0xff]
        %v331 = vld [vmem:[#allocation6 + $0x68] sm:$0xff]
        %v332 = vld [vmem:[#allocation6 + $0x70] sm:$0xff]
        %v333 = vld [vmem:[#allocation6 + $0x78] sm:$0xff]
        %v334 = vld [vmem:[%s309] sm:$0x1]
        %v336 = vlaneseq
        %v337 = vshrl.u32 %v336, 7
        %v338 = vsub.s32 0, %v337
        %v339 = vrot.slane %v334, %v338
        %341 = vmatprep.subr.mxu0 0.0
        %342 = vmatpush1.msra.mxu0 %v333
        %343 = vmatprep.subr.mxu0 0.0
        %344 = vmatpush1.msra.mxu0 %v332
        %345 = vmatprep.subr.mxu0 0.0
        %346 = vmatpush1.msra.mxu0 %v331
        %347 = vmatprep.subr.mxu0 0.0
        %348 = vmatpush1.msra.mxu0 %v330
        %349 = vmatprep.subr.mxu0 0.0
        %350 = vmatpush1.msra.mxu0 %v329
        %351 = vmatprep.subr.mxu0 0.0
        %352 = vmatpush1.msra.mxu0 %v328
        %353 = vmatprep.subr.mxu0 0.0
        %354 = vmatpush1.msra.mxu0 %v327
        %355 = vmatprep.subr.mxu0 0.0
        %356 = vmatpush1.msra.mxu0 %v326
        %357 = vmatprep.subr.mxu0 0.0
        %358 = vmatpush1.msra.mxu0 %v325
        %359 = vmatprep.subr.mxu0 0.0
        %360 = vmatpush1.msra.mxu0 %v324
        %361 = vmatprep.subr.mxu0 0.0
        %362 = vmatpush1.msra.mxu0 %v323
        %363 = vmatprep.subr.mxu0 0.0
        %364 = vmatpush1.msra.mxu0 %v322
        %365 = vmatprep.subr.mxu0 0.0
        %366 = vmatpush1.msra.mxu0 %v321
        %367 = vmatprep.subr.mxu0 0.0
        %368 = vmatpush1.msra.mxu0 %v320
        %369 = vmatprep.subr.mxu0 0.0
        %370 = vmatpush1.msra.mxu0 %v319
        %371 = vmatprep.subr.mxu0 0.0
        %372 = vmatpush1.msra.mxu0 %v318
        %373 = vmatprep.subr.mxu0 0.0
        %374 = vmatpush2.msra.mxu0 0.0
        %375 = vmatprep.subr.mxu0 0.0
        %376 = vmatpush2.msra.mxu0 0.0
        %377 = vmatprep.subr.mxu0 0.0
        %378 = vmatpush2.msra.mxu0 0.0
        %379 = vmatprep.subr.mxu0 0.0
        %380 = vmatpush2.msra.mxu0 0.0
        %381 = vmatprep.subr.mxu0 0.0
        %382 = vmatpush2.msra.mxu0 0.0
        %383 = vmatprep.subr.mxu0 0.0
        %384 = vmatpush2.msra.mxu0 0.0
        %385 = vmatprep.subr.mxu0 0.0
        %386 = vmatpush2.msra.mxu0 0.0
        %387 = vmatprep.subr.mxu0 0.0
        %388 = vmatpush2.msra.mxu0 0.0
        %389 = vmatprep.subr.mxu0 0.0
        %390 = vmatpush2.msra.mxu0 0.0
        %391 = vmatprep.subr.mxu0 0.0
        %392 = vmatpush2.msra.mxu0 0.0
        %393 = vmatprep.subr.mxu0 0.0
        %394 = vmatpush2.msra.mxu0 0.0
        %395 = vmatprep.subr.mxu0 0.0
        %396 = vmatpush2.msra.mxu0 0.0
        %397 = vmatprep.subr.mxu0 0.0
        %398 = vmatpush2.msra.mxu0 0.0
        %399 = vmatprep.subr.mxu0 0.0
        %400 = vmatpush2.msra.mxu0 0.0
        %401 = vmatprep.subr.mxu0 0.0
        %402 = vmatpush2.msra.mxu0 0.0
        %403 = vmatprep.subr.mxu0 0.0
        %404 = vmatpush2.msra.mxu0 0.0
        %405 = vmatprep.mubr.f32.mxu0 0.0
        %406 = vmatmul.mubr.f32.gmra.mxu0 %v317
        %v407 = vpop.f32.mrf.mxu0
        %v408 = vadd.f32 %v339, %v407
        %v409 = vpop.f32.mrf.mxu0
        %410 = vdwg.mxu0
        %v411 = vmax.f32 %v408, 0.0
        %412 = vst [vmem:[#allocation2 + $0x8] sm:$0xff] %v411
        %v413 = vld [vmem:[#allocation2 + $0x7] sm:$0xff]
        %v414 = vld [vmem:[#allocation8] sm:$0xff]
        %v415 = vld [vmem:[#allocation8 + $0x8] sm:$0xff]
        %v416 = vld [vmem:[#allocation8 + $0x10] sm:$0xff]
        %v417 = vld [vmem:[#allocation8 + $0x18] sm:$0xff]
        %v418 = vld [vmem:[#allocation8 + $0x20] sm:$0xff]
        %v419 = vld [vmem:[#allocation8 + $0x28] sm:$0xff]
        %v420 = vld [vmem:[#allocation8 + $0x30] sm:$0xff]
        %v421 = vld [vmem:[#allocation8 + $0x38] sm:$0xff]
        %v422 = vld [vmem:[#allocation8 + $0x40] sm:$0xff]
        %v423 = vld [vmem:[#allocation8 + $0x48] sm:$0xff]
        %v424 = vld [vmem:[#allocation8 + $0x50] sm:$0xff]
        %v425 = vld [vmem:[#allocation8 + $0x58] sm:$0xff]
        %v426 = vld [vmem:[#allocation8 + $0x60] sm:$0xff]
        %v427 = vld [vmem:[#allocation8 + $0x68] sm:$0xff]
        %v428 = vld [vmem:[#allocation8 + $0x70] sm:$0xff]
        %v429 = vld [vmem:[#allocation8 + $0x78] sm:$0xff]
        %v430 = vld [vmem:[#allocation2 + $0x8] sm:$0xff]
        %s431 = scalar_lea.vmem [#allocation8], 128
        %v432 = vld [vmem:[%s431] sm:$0xff]
        %v433 = vld [vmem:[%s431 + $0x8] sm:$0xff]
        %v434 = vld [vmem:[%s431 + $0x10] sm:$0xff]
        %v435 = vld [vmem:[%s431 + $0x18] sm:$0xff]
        %v436 = vld [vmem:[%s431 + $0x20] sm:$0xff]
        %v437 = vld [vmem:[%s431 + $0x28] sm:$0xff]
        %v438 = vld [vmem:[%s431 + $0x30] sm:$0xff]
        %v439 = vld [vmem:[%s431 + $0x38] sm:$0xff]
        %v440 = vld [vmem:[%s431 + $0x40] sm:$0xff]
        %v441 = vld [vmem:[%s431 + $0x48] sm:$0xff]
        %v442 = vld [vmem:[%s431 + $0x50] sm:$0xff]
        %v443 = vld [vmem:[%s431 + $0x58] sm:$0xff]
        %v444 = vld [vmem:[%s431 + $0x60] sm:$0xff]
        %v445 = vld [vmem:[%s431 + $0x68] sm:$0xff]
        %v446 = vld [vmem:[%s431 + $0x70] sm:$0xff]
        %v447 = vld [vmem:[%s431 + $0x78] sm:$0xff]
        %448 = vmatprep.subr.mxu0 0.0
        %449 = vmatpush1.msra.mxu0 %v447
        %450 = vmatprep.subr.mxu0 0.0
        %451 = vmatpush1.msra.mxu0 %v446
        %452 = vmatprep.subr.mxu0 0.0
        %453 = vmatpush1.msra.mxu0 %v445
        %454 = vmatprep.subr.mxu0 0.0
        %455 = vmatpush1.msra.mxu0 %v444
        %456 = vmatprep.subr.mxu0 0.0
        %457 = vmatpush1.msra.mxu0 %v443
        %458 = vmatprep.subr.mxu0 0.0
        %459 = vmatpush1.msra.mxu0 %v442
        %460 = vmatprep.subr.mxu0 0.0
        %461 = vmatpush1.msra.mxu0 %v441
        %462 = vmatprep.subr.mxu0 0.0
        %463 = vmatpush1.msra.mxu0 %v440
        %464 = vmatprep.subr.mxu0 0.0
        %465 = vmatpush1.msra.mxu0 %v439
        %466 = vmatprep.subr.mxu0 0.0
        %467 = vmatpush1.msra.mxu0 %v438
        %468 = vmatprep.subr.mxu0 0.0
        %469 = vmatpush1.msra.mxu0 %v437
        %470 = vmatprep.subr.mxu0 0.0
        %471 = vmatpush1.msra.mxu0 %v436
        %472 = vmatprep.subr.mxu0 0.0
        %473 = vmatpush1.msra.mxu0 %v435
        %474 = vmatprep.subr.mxu0 0.0
        %475 = vmatpush1.msra.mxu0 %v434
        %476 = vmatprep.subr.mxu0 0.0
        %477 = vmatpush1.msra.mxu0 %v433
        %478 = vmatprep.subr.mxu0 0.0
        %479 = vmatpush1.msra.mxu0 %v432
        %480 = vmatprep.subr.mxu0 0.0
        %481 = vmatpush2.msra.mxu0 0.0
        %482 = vmatprep.subr.mxu0 0.0
        %483 = vmatpush2.msra.mxu0 0.0
        %484 = vmatprep.subr.mxu0 0.0
        %485 = vmatpush2.msra.mxu0 0.0
        %486 = vmatprep.subr.mxu0 0.0
        %487 = vmatpush2.msra.mxu0 0.0
        %488 = vmatprep.subr.mxu0 0.0
        %489 = vmatpush2.msra.mxu0 0.0
        %490 = vmatprep.subr.mxu0 0.0
        %491 = vmatpush2.msra.mxu0 0.0
        %492 = vmatprep.subr.mxu0 0.0
        %493 = vmatpush2.msra.mxu0 0.0
        %494 = vmatprep.subr.mxu0 0.0
        %495 = vmatpush2.msra.mxu0 0.0
        %496 = vmatprep.subr.mxu0 0.0
        %497 = vmatpush2.msra.mxu0 0.0
        %498 = vmatprep.subr.mxu0 0.0
        %499 = vmatpush2.msra.mxu0 0.0
        %500 = vmatprep.subr.mxu0 0.0
        %501 = vmatpush2.msra.mxu0 0.0
        %502 = vmatprep.subr.mxu0 0.0
        %503 = vmatpush2.msra.mxu0 0.0
        %504 = vmatprep.subr.mxu0 0.0
        %505 = vmatpush2.msra.mxu0 0.0
        %506 = vmatprep.subr.mxu0 0.0
        %507 = vmatpush2.msra.mxu0 0.0
        %508 = vmatprep.subr.mxu0 0.0
        %509 = vmatpush2.msra.mxu0 0.0
        %510 = vmatprep.subr.mxu0 0.0
        %511 = vmatpush2.msra.mxu0 0.0
        %512 = vmatprep.mubr.f32.mxu0 0.0
        %513 = vmatmul.mubr.f32.gmra.mxu0 %v430
        %v514 = vpop.f32.mrf.mxu0
        %v515 = vadd.f32 0.0, %v514
        %v516 = vpop.f32.mrf.mxu0
        %517 = vdwg.mxu0
        %518 = vmatprep.subr.mxu0 0.0
        %519 = vmatpush1.msra.mxu0 %v429
        %520 = vmatprep.subr.mxu0 0.0
        %521 = vmatpush1.msra.mxu0 %v428
        %522 = vmatprep.subr.mxu0 0.0
        %523 = vmatpush1.msra.mxu0 %v427
        %524 = vmatprep.subr.mxu0 0.0
        %525 = vmatpush1.msra.mxu0 %v426
        %526 = vmatprep.subr.mxu0 0.0
        %527 = vmatpush1.msra.mxu0 %v425
        %528 = vmatprep.subr.mxu0 0.0
        %529 = vmatpush1.msra.mxu0 %v424
        %530 = vmatprep.subr.mxu0 0.0
        %531 = vmatpush1.msra.mxu0 %v423
        %532 = vmatprep.subr.mxu0 0.0
        %533 = vmatpush1.msra.mxu0 %v422
        %534 = vmatprep.subr.mxu0 0.0
        %535 = vmatpush1.msra.mxu0 %v421
        %536 = vmatprep.subr.mxu0 0.0
        %537 = vmatpush1.msra.mxu0 %v420
        %538 = vmatprep.subr.mxu0 0.0
        %539 = vmatpush1.msra.mxu0 %v419
        %540 = vmatprep.subr.mxu0 0.0
        %541 = vmatpush1.msra.mxu0 %v418
        %542 = vmatprep.subr.mxu0 0.0
        %543 = vmatpush1.msra.mxu0 %v417
        %544 = vmatprep.subr.mxu0 0.0
        %545 = vmatpush1.msra.mxu0 %v416
        %546 = vmatprep.subr.mxu0 0.0
        %547 = vmatpush1.msra.mxu0 %v415
        %548 = vmatprep.subr.mxu0 0.0
        %549 = vmatpush1.msra.mxu0 %v414
        %550 = vmatprep.subr.mxu0 0.0
        %551 = vmatpush2.msra.mxu0 0.0
        %552 = vmatprep.subr.mxu0 0.0
        %553 = vmatpush2.msra.mxu0 0.0
        %554 = vmatprep.subr.mxu0 0.0
        %555 = vmatpush2.msra.mxu0 0.0
        %556 = vmatprep.subr.mxu0 0.0
        %557 = vmatpush2.msra.mxu0 0.0
        %558 = vmatprep.subr.mxu0 0.0
        %559 = vmatpush2.msra.mxu0 0.0
        %560 = vmatprep.subr.mxu0 0.0
        %561 = vmatpush2.msra.mxu0 0.0
        %562 = vmatprep.subr.mxu0 0.0
        %563 = vmatpush2.msra.mxu0 0.0
        %564 = vmatprep.subr.mxu0 0.0
        %565 = vmatpush2.msra.mxu0 0.0
        %566 = vmatprep.subr.mxu0 0.0
        %567 = vmatpush2.msra.mxu0 0.0
        %568 = vmatprep.subr.mxu0 0.0
        %569 = vmatpush2.msra.mxu0 0.0
        %570 = vmatprep.subr.mxu0 0.0
        %571 = vmatpush2.msra.mxu0 0.0
        %572 = vmatprep.subr.mxu0 0.0
        %573 = vmatpush2.msra.mxu0 0.0
        %574 = vmatprep.subr.mxu0 0.0
        %575 = vmatpush2.msra.mxu0 0.0
        %576 = vmatprep.subr.mxu0 0.0
        %577 = vmatpush2.msra.mxu0 0.0
        %578 = vmatprep.subr.mxu0 0.0
        %579 = vmatpush2.msra.mxu0 0.0
        %580 = vmatprep.subr.mxu0 0.0
        %581 = vmatpush2.msra.mxu0 0.0
        %582 = vmatprep.mubr.f32.mxu0 0.0
        %583 = vmatmul.mubr.f32.gmra.mxu0 %v413
        %v584 = vpop.f32.mrf.mxu0
        %v585 = vadd.f32 %v515, %v584
        %v586 = vpop.f32.mrf.mxu0
        %587 = vdwg.mxu0
        %v588 = vld [vmem:[#allocation2 + $0x9] sm:$0xff]
        %s589 = scalar_lea.vmem [#allocation8], 256
        %v590 = vld [vmem:[%s589] sm:$0xff]
        %v591 = vld [vmem:[%s589 + $0x8] sm:$0xff]
        %v592 = vld [vmem:[%s589 + $0x10] sm:$0xff]
        %v593 = vld [vmem:[%s589 + $0x18] sm:$0xff]
        %v594 = vld [vmem:[%s589 + $0x20] sm:$0xff]
        %v595 = vld [vmem:[%s589 + $0x28] sm:$0xff]
        %v596 = vld [vmem:[%s589 + $0x30] sm:$0xff]
        %v597 = vld [vmem:[%s589 + $0x38] sm:$0xff]
        %v598 = vld [vmem:[%s589 + $0x40] sm:$0xff]
        %v599 = vld [vmem:[%s589 + $0x48] sm:$0xff]
        %v600 = vld [vmem:[%s589 + $0x50] sm:$0xff]
        %v601 = vld [vmem:[%s589 + $0x58] sm:$0xff]
        %v602 = vld [vmem:[%s589 + $0x60] sm:$0xff]
        %v603 = vld [vmem:[%s589 + $0x68] sm:$0xff]
        %v604 = vld [vmem:[%s589 + $0x70] sm:$0xff]
        %v605 = vld [vmem:[%s589 + $0x78] sm:$0xff]
        %606 = vmatprep.subr.mxu0 0.0
        %607 = vmatpush1.msra.mxu0 %v605
        %608 = vmatprep.subr.mxu0 0.0
        %609 = vmatpush1.msra.mxu0 %v604
        %610 = vmatprep.subr.mxu0 0.0
        %611 = vmatpush1.msra.mxu0 %v603
        %612 = vmatprep.subr.mxu0 0.0
        %613 = vmatpush1.msra.mxu0 %v602
        %614 = vmatprep.subr.mxu0 0.0
        %615 = vmatpush1.msra.mxu0 %v601
        %616 = vmatprep.subr.mxu0 0.0
        %617 = vmatpush1.msra.mxu0 %v600
        %618 = vmatprep.subr.mxu0 0.0
        %619 = vmatpush1.msra.mxu0 %v599
        %620 = vmatprep.subr.mxu0 0.0
        %621 = vmatpush1.msra.mxu0 %v598
        %622 = vmatprep.subr.mxu0 0.0
        %623 = vmatpush1.msra.mxu0 %v597
        %624 = vmatprep.subr.mxu0 0.0
        %625 = vmatpush1.msra.mxu0 %v596
        %626 = vmatprep.subr.mxu0 0.0
        %627 = vmatpush1.msra.mxu0 %v595
        %628 = vmatprep.subr.mxu0 0.0
        %629 = vmatpush1.msra.mxu0 %v594
        %630 = vmatprep.subr.mxu0 0.0
        %631 = vmatpush1.msra.mxu0 %v593
        %632 = vmatprep.subr.mxu0 0.0
        %633 = vmatpush1.msra.mxu0 %v592
        %634 = vmatprep.subr.mxu0 0.0
        %635 = vmatpush1.msra.mxu0 %v591
        %636 = vmatprep.subr.mxu0 0.0
        %637 = vmatpush1.msra.mxu0 %v590
        %638 = vmatprep.subr.mxu0 0.0
        %639 = vmatpush2.msra.mxu0 0.0
        %640 = vmatprep.subr.mxu0 0.0
        %641 = vmatpush2.msra.mxu0 0.0
        %642 = vmatprep.subr.mxu0 0.0
        %643 = vmatpush2.msra.mxu0 0.0
        %644 = vmatprep.subr.mxu0 0.0
        %645 = vmatpush2.msra.mxu0 0.0
        %646 = vmatprep.subr.mxu0 0.0
        %647 = vmatpush2.msra.mxu0 0.0
        %648 = vmatprep.subr.mxu0 0.0
        %649 = vmatpush2.msra.mxu0 0.0
        %650 = vmatprep.subr.mxu0 0.0
        %651 = vmatpush2.msra.mxu0 0.0
        %652 = vmatprep.subr.mxu0 0.0
        %653 = vmatpush2.msra.mxu0 0.0
        %654 = vmatprep.subr.mxu0 0.0
        %655 = vmatpush2.msra.mxu0 0.0
        %656 = vmatprep.subr.mxu0 0.0
        %657 = vmatpush2.msra.mxu0 0.0
        %658 = vmatprep.subr.mxu0 0.0
        %659 = vmatpush2.msra.mxu0 0.0
        %660 = vmatprep.subr.mxu0 0.0
        %661 = vmatpush2.msra.mxu0 0.0
        %662 = vmatprep.subr.mxu0 0.0
        %663 = vmatpush2.msra.mxu0 0.0
        %664 = vmatprep.subr.mxu0 0.0
        %665 = vmatpush2.msra.mxu0 0.0
        %666 = vmatprep.subr.mxu0 0.0
        %667 = vmatpush2.msra.mxu0 0.0
        %668 = vmatprep.subr.mxu0 0.0
        %669 = vmatpush2.msra.mxu0 0.0
        %670 = vmatprep.mubr.f32.mxu0 0.0
        %671 = vmatmul.mubr.f32.gmra.mxu0 %v588
        %v672 = vpop.f32.mrf.mxu0
        %v673 = vadd.f32 0.0, %v672
        %v674 = vpop.f32.mrf.mxu0
        %675 = vdwg.mxu0
        %v676 = vadd.f32 %v585, %v673
        %v677 = vld [vmem:[%s4] sm:$0x1]
        %v679 = vlaneseq
        %v680 = vshrl.u32 %v679, 7
        %v681 = vsub.s32 0, %v680
        %v682 = vrot.slane %v677, %v681
        %v684 = vadd.f32 %v676, %v682
        %685 = vst [vmem:[%s306] sm:$0xff] %v684
        %s686 = sand.u32 %s168, 1
        %s687 = scalar_lea.sflag [#allocation5], %s686
        %s688 = sand.u32 %s168, 1
        %s689 = smul.addr %s688, 8
        %s690 = scalar_lea.vmem [#allocation9], %s689
        // Predicated region
        $region57: #{tpu_custom_call.1} parent=39 // pred_check
          %p691 = pneg %p178
        $region58: #{tpu_custom_call.1} parent=39 // pred_check_branch
          %693 = sbr.rel (%p691) target = $region60
        $region59: #{tpu_custom_call.1} parent=39 // pred_region
          %s695 = ssub.s32 128, 128
          %696 = vsyncadd %s687, %s695
          %s697 = smul.addr %s27, 128
          %s698 = scalar_lea.hbm %s5, %s697
          %s700 = sshll.u32 %s690, 4
          %s701 = int_to_ptr.vmem [resolvable:$true] %s700
          %703 = dma.vmem_to_hbm [thread:$0]  %s701, 128, %s698, %s687
        $region60: #{tpu_custom_call.1} parent=39 // pred_fallthru
          _
      $region40: #{tpu_custom_call.1} parent=5 // pred_fallthru
        _
      %p704 = scmp.le.s32.totalorder 2, %s18
      // Predicated region
      $region61: #{tpu_custom_call.1} parent=5 // pred_check
        %p705 = pneg %p704
      $region62: #{tpu_custom_call.1} parent=5 // pred_check_branch
        %707 = sbr.rel (%p705) target = $region64
      $region63: #{tpu_custom_call.1} parent=5 // pred_region
        %s708 = ssub.s32 %s18, 2
        // Predicated region
        $region65: #{tpu_custom_call.1} parent=63 // pred_check
          %p709 = pneg %p184
        $region66: #{tpu_custom_call.1} parent=63 // pred_check_branch
          %711 = sbr.rel (%p709) target = $region68
        $region67: #{tpu_custom_call.1} parent=63 // pred_region
          %s712 = sand.u32 %s169, 1
          %s713 = scalar_lea.sflag [#allocation5], %s712
          %s714 = sand.u32 %s169, 1
          %s715 = smul.addr %s714, 8
          %s716 = scalar_lea.vmem [#allocation9], %s715
          %717 = dma.done %s713, 128
        $region68: #{tpu_custom_call.1} parent=63 // pred_fallthru
          _
      $region64: #{tpu_custom_call.1} parent=5 // pred_fallthru
        _
    $region6: #{tpu_custom_call.1} parent=1 // loop_footer
      %s22 = sadd.s32 1, %s18
    $region7: #{tpu_custom_call.1} parent=1 // loop_footer_branch
      %17 = sbr.rel target = $region3
    $region8: #{tpu_custom_call.1} parent=1 // loop_exit
      _
    %718 = vsyncpa [#allocation4], 1
    %s719 = scalar_lea.sflag [#allocation4], 1
    %720 = vsyncpa %s719, 1
    %721 = vsyncpa [#allocation7], 1
    %722 = vsyncpa [#allocation5], 1
    %s723 = scalar_lea.sflag [#allocation5], 1
    %724 = vsyncpa %s723, 1

</llo_original>
